<compile_context>
chip_gen: v6e
topology: v6e:2x2x1
jax: 0.10.0
libtpu: 0.0.40
codegen_flags: <defaults>
</compile_context>

<pallas_src>
import functools

import jax
import jax.numpy as jnp
from jax import lax
from jax.experimental import pallas as pl
from jax.experimental.pallas import tpu as pltpu

EXPERT_NUM = 4
CONV_K = 32  # Conv1d kernel == stride in Router


def _mixture_kernel(x_ref, w_ref, be_ref, out_ref, sel0_ref, sel_ref,
                    *, expert_num, out_dim):
    E, O = expert_num, out_dim
    x = x_ref[...]                                   # [TB, D] (bf16 or f32)
    TB = x.shape[0]

    # --- Fused experts + router: single lane-dense contraction [TB,D] x [D,NPAD] -------
    y = jnp.dot(x, w_ref[...], preferred_element_type=jnp.float32)   # [TB, NPAD] f32
    h = y[:, :E * O] + be_ref[...]                   # expert pre-activations, [TB, E*O]
    logits = y[:, E * O:E * O + E]                   # folded Conv1d router logits, [TB, E]
    # TODO(synk): training-mode uniform router noise is omitted (eval semantics).

    # --- Router softmax + top-1 ---------------------------------------------------------
    m = jnp.max(logits, axis=1, keepdims=True)
    ez = jnp.exp(logits - m)
    sel = ez * pl.reciprocal(jnp.sum(ez, axis=1, keepdims=True), approx=True)   # [TB, E]
    sel_ref[...] = sel.astype(sel_ref.dtype)         # needed by wrapper for density_proxy

    # top-1: value = max, index = first argmax (matches torch.topk tie-break).
    # gate is max of the SAME `sel` array, so the float equality below is exact.
    gate = jnp.max(sel, axis=1, keepdims=True)                               # [TB, 1]
    iota_e = lax.broadcasted_iota(jnp.int32, (TB, E), 1)
    idx = jnp.min(jnp.where(sel == gate, iota_e, E), axis=1, keepdims=True)  # [TB, 1]
    mask = (iota_e == idx).astype(jnp.float32)                               # one-hot
    # dispatch == mask (gate > 0 always after softmax), so select0 is just the one-hot.
    sel0_ref[...] = mask.astype(sel0_ref.dtype)

    # --- Cube + combine: weight each expert's O-lane group with a [TB,1] column --------
    h3 = h * h * h                                   # (fc1(x))**3 for all experts at once
    acc = jnp.zeros((TB, O), jnp.float32)
    for e in range(E):                               # E static -> unrolled
        cw_e = jnp.where(idx == e, gate, 0.0)        # [TB, 1] combine weight of expert e
        acc = acc + h3[:, e * O:(e + 1) * O] * cw_e

    # --- final softmax over out_dim -----------------------------------------------------
    m2 = jnp.max(acc, axis=1, keepdims=True)
    e2 = jnp.exp(acc - m2)
    out_ref[...] = (e2 * pl.reciprocal(jnp.sum(e2, axis=1, keepdims=True),
                                       approx=True)).astype(out_ref.dtype)


def nonlinear_mixture_forward(x, router_w, expert_w, expert_b,
                              *, block_b=512, matmul_dtype=jnp.bfloat16):
    """x: [B, D]; router_w: [E, 1, 32] (Conv1d weight); expert_w: [E, O, D]; expert_b: [E, O].

    matmul_dtype=bf16 (default) halves the x/weight DMA bytes and feeds the bf16 MXU on
    v6e/v7x; elementwise math stays f32.  Pass jnp.float32 for bit-closer PyTorch numerics.
    """
    B, D = x.shape
    E, _, K = router_w.shape
    O = expert_w.shape[1]
    L = (D - K) // K + 1  # number of conv output positions

    # Fold Conv1d(kernel=stride=32, no bias) + length-sum into a dense [D, E] matrix.
    w_tiled = jnp.transpose(jnp.tile(router_w[:, 0, :], (1, L)))             # [L*K, E]
    dense_router = jnp.zeros((D, E), jnp.float32).at[:L * K, :].set(w_tiled)

    # Stack expert weights into [D, E*O] and fuse the router into one [D, NPAD] slab.
    we = jnp.transpose(expert_w, (2, 0, 1)).reshape(D, E * O)                # [D, E*O]
    n_used = E * O + E
    n_pad = pl.cdiv(n_used, 128) * 128                                       # 256 at defaults
    w_full = jnp.zeros((D, n_pad), jnp.float32)
    w_full = w_full.at[:, :E * O].set(we).at[:, E * O:n_used].set(dense_router)
    be = expert_b.reshape(1, E * O).astype(jnp.float32)                      # [1, E*O]

    # Batch tiling: TB multiple of 8 (capped at block_b); pad B up to a multiple of TB so
    # the grid never collapses to a single huge block.
    TB = min(block_b, ((B + 7) // 8) * 8)
    TB = max(8, (TB // 8) * 8)
    B_pad = pl.cdiv(B, TB) * TB
    x_in = x if B_pad == B else jnp.pad(x, ((0, B_pad - B), (0, 0)))
    grid = (B_pad // TB,)
    # TODO(synk): if D / E*O ever scale up, tile the resident [D, NPAD] weight slab over the
    # lane axis against v7x's 64 MiB VMEM budget (at current sizes it is only ~64 KiB).

    out, sel0, sel = pl.pallas_call(
        functools.partial(_mixture_kernel, expert_num=E, out_dim=O),
        out_shape=(
            jax.ShapeDtypeStruct((B_pad, O), jnp.float32),   # softmaxed mixture output
            jax.ShapeDtypeStruct((B_pad, E), jnp.float32),   # select0 (dispatch / one-hot)
            jax.ShapeDtypeStruct((B_pad, E), jnp.float32),   # router softmax (for the loss)
        ),
        grid_spec=pltpu.PrefetchScalarGridSpec(
            num_scalar_prefetch=0,
            grid=grid,
            in_specs=[
                pl.BlockSpec((TB, D), lambda i: (i, 0)),       # x: tiled over batch
                pl.BlockSpec((D, n_pad), lambda i: (0, 0)),    # fused expert+router weights
                pl.BlockSpec((1, E * O), lambda i: (0, 0)),    # stacked expert biases
            ],
            out_specs=(
                pl.BlockSpec((TB, O), lambda i: (i, 0)),
                pl.BlockSpec((TB, E), lambda i: (i, 0)),
                pl.BlockSpec((TB, E), lambda i: (i, 0)),
            ),
        ),
        # No cross-block state anymore -> batch axis can shard across v7x's 2 TensorCores.
        compiler_params=pltpu.CompilerParams(dimension_semantics=("parallel",)),
    )(x_in.astype(matmul_dtype), w_full.astype(matmul_dtype), be)

    out = out[:B]
    sel0 = sel0[:B]
    sel = sel[:B]

    # Full-batch load-balancing loss (tiny XLA reduction over [B, E] outputs).
    density = jnp.mean(sel0, axis=0)                 # mean of one-hot over batch
    density_proxy = jnp.mean(sel, axis=0)            # mean of router softmax over batch
    loss = jnp.mean(density_proxy * density) * float(E ** 2)
    return out, sel0, loss


if __name__ == "__main__":
    key = jax.random.PRNGKey(0)
    B, D, O, E = 8, 64, 32, EXPERT_NUM   # D must be >= 32 for the Conv1d(kernel=32)
    kx, kw, kb = jax.random.split(key, 3)

    x = jax.random.normal(kx, (B, D), dtype=jnp.float32)

    # Router.reset_parameters(): conv weight * 0 -> zeros (deterministic).
    router_w = jnp.zeros((E, 1, CONV_K), jnp.float32)

    # NonlinearClassifier.reset_parameters(): default Linear init, then * 0.001.
    bound = float(1.0 / (D ** 0.5))
    expert_w = jax.random.uniform(kw, (E, O, D), jnp.float32, -bound, bound) * 0.001
    expert_b = jax.random.uniform(kb, (E, O), jnp.float32, -bound, bound) * 0.001

    out, sel0, loss = nonlinear_mixture_forward(x, router_w, expert_w, expert_b)
    jax.block_until_ready((out, sel0, loss))

    assert out.shape == (B, O) and sel0.shape == (B, E) and loss.shape == ()
    assert bool(jnp.all(jnp.isfinite(out))) and bool(jnp.isfinite(loss))
    print("KERNEL_OK")
</pallas_src>

<mosaic_0001>
module attributes {stable_mosaic.version = 11 : i64} {
  func.func @_mixture_kernel(%arg0: i32, %arg1: memref<8x64xbf16, #tpu.memory_space<vmem>>, %arg2: memref<64x256xbf16, #tpu.memory_space<vmem>>, %arg3: memref<1x128xf32, #tpu.memory_space<vmem>>, %arg4: memref<8x32xf32, #tpu.memory_space<vmem>>, %arg5: memref<8x4xf32, #tpu.memory_space<vmem>>, %arg6: memref<8x4xf32, #tpu.memory_space<vmem>>) attributes {dimension_semantics = [#tpu.dimension_semantics<parallel>], iteration_bounds = array<i64: 1>, scalar_prefetch = 0 : i64, scratch_operands = 0 : i64, tpu.core_type = #tpu.core_type<tc>, window_params = [{transform_indices = @transform_0, window_bounds = array<i64: 8, 64>}, {pipeline_mode = #tpu.pipeline_mode<synchronous>, transform_indices = @transform_1, window_bounds = array<i64: 64, 256>}, {pipeline_mode = #tpu.pipeline_mode<synchronous>, transform_indices = @transform_2, window_bounds = array<i64: 1, 128>}, {transform_indices = @transform_3, window_bounds = array<i64: 8, 32>}, {transform_indices = @transform_4, window_bounds = array<i64: 8, 4>}, {transform_indices = @transform_5, window_bounds = array<i64: 8, 4>}]} {
    %c0 = arith.constant 0 : index
    %c0_0 = arith.constant 0 : index
    %0 = vector.load %arg1[%c0, %c0_0] : memref<8x64xbf16, #tpu.memory_space<vmem>>, vector<8x64xbf16>
    %c0_1 = arith.constant 0 : index
    %c0_2 = arith.constant 0 : index
    %1 = vector.load %arg2[%c0_1, %c0_2] : memref<64x256xbf16, #tpu.memory_space<vmem>>, vector<64x256xbf16>
    %cst = arith.constant dense<0.000000e+00> : vector<8x256xf32>
    %2 = tpu.matmul %0, %1, %cst {dimension_numbers = #tpu.dot_dimension_numbers<[1], [0], [0], [1], [0, 0, 1, 1], [], []>} : vector<8x64xbf16>, vector<64x256xbf16>, vector<8x256xf32> -> vector<8x256xf32>
    %3 = vector.extract_strided_slice %2 {offsets = [0, 0], sizes = [8, 128], strides = [1, 1]} : vector<8x256xf32> to vector<8x128xf32>
    %c0_3 = arith.constant 0 : index
    %c0_4 = arith.constant 0 : index
    %4 = vector.load %arg3[%c0_3, %c0_4] : memref<1x128xf32, #tpu.memory_space<vmem>>, vector<1x128xf32>
    %5 = vector.broadcast %4 : vector<1x128xf32> to vector<8x128xf32>
    %6 = arith.addf %3, %5 : vector<8x128xf32>
    %7 = vector.extract_strided_slice %2 {offsets = [0, 128], sizes = [8, 4], strides = [1, 1]} : vector<8x256xf32> to vector<8x4xf32>
    %cst_5 = arith.constant dense<0xFF800000> : vector<8xf32>
    %8 = vector.multi_reduction <maximumf>, %7, %cst_5 [1] : vector<8x4xf32> to vector<8xf32>
    %9 = vector.shape_cast %8 : vector<8xf32> to vector<8x1xf32>
    %10 = vector.broadcast %9 : vector<8x1xf32> to vector<8x4xf32>
    %11 = arith.subf %7, %10 : vector<8x4xf32>
    %12 = math.exp %11 : vector<8x4xf32>
    %cst_6 = arith.constant dense<0.000000e+00> : vector<8xf32>
    %13 = vector.multi_reduction <add>, %12, %cst_6 [1] : vector<8x4xf32> to vector<8xf32>
    %14 = vector.shape_cast %13 : vector<8xf32> to vector<8x1xf32>
    %15 = tpu.reciprocal %14 {approx = true} : vector<8x1xf32> -> vector<8x1xf32>
    %16 = vector.broadcast %15 : vector<8x1xf32> to vector<8x4xf32>
    %17 = arith.mulf %12, %16 : vector<8x4xf32>
    %c0_7 = arith.constant 0 : index
    %c0_8 = arith.constant 0 : index
    %18 = vector.load %arg6[%c0_7, %c0_8] : memref<8x4xf32, #tpu.memory_space<vmem>>, vector<8x4xf32>
    tpu.vector_store %arg6[%c0_7, %c0_8], %17 {strides = array<i32>} : memref<8x4xf32, #tpu.memory_space<vmem>>, vector<8x4xf32>,
    %cst_9 = arith.constant dense<0xFF800000> : vector<8xf32>
    %19 = vector.multi_reduction <maximumf>, %17, %cst_9 [1] : vector<8x4xf32> to vector<8xf32>
    %20 = vector.shape_cast %19 : vector<8xf32> to vector<8x1xf32>
    %21 = tpu.iota {dimensions = array<i32: 1>} : vector<8x4xi32>
    %22 = vector.broadcast %20 : vector<8x1xf32> to vector<8x4xf32>
    %23 = arith.cmpf oeq, %17, %22 : vector<8x4xf32>
    %c4_i32 = arith.constant 4 : i32
    %24 = vector.broadcast %c4_i32 : i32 to vector<8x4xi32>
    %25 = arith.select %23, %21, %24 : vector<8x4xi1>, vector<8x4xi32>
    %cst_10 = arith.constant dense<2147483647> : vector<8xi32>
    %26 = vector.multi_reduction <minsi>, %25, %cst_10 [1] : vector<8x4xi32> to vector<8xi32>
    %27 = vector.shape_cast %26 : vector<8xi32> to vector<8x1xi32>
    %28 = vector.broadcast %27 : vector<8x1xi32> to vector<8x4xi32>
    %29 = arith.cmpi eq, %21, %28 : vector<8x4xi32>
    %30 = arith.extui %29 : vector<8x4xi1> to vector<8x4xi32>
    %31 = arith.sitofp %30 : vector<8x4xi32> to vector<8x4xf32>
    %c0_11 = arith.constant 0 : index
    %c0_12 = arith.constant 0 : index
    %32 = vector.load %arg5[%c0_11, %c0_12] : memref<8x4xf32, #tpu.memory_space<vmem>>, vector<8x4xf32>
    tpu.vector_store %arg5[%c0_11, %c0_12], %31 {strides = array<i32>} : memref<8x4xf32, #tpu.memory_space<vmem>>, vector<8x4xf32>,
    %33 = arith.mulf %6, %6 : vector<8x128xf32>
    %34 = arith.mulf %33, %6 : vector<8x128xf32>
    %cst_13 = arith.constant 0.000000e+00 : f32
    %35 = vector.broadcast %cst_13 : f32 to vector<8x32xf32>
    %c0_i32 = arith.constant 0 : i32
    %36 = vector.broadcast %c0_i32 : i32 to vector<8x1xi32>
    %37 = arith.cmpi eq, %27, %36 : vector<8x1xi32>
    %cst_14 = arith.constant 0.000000e+00 : f32
    %38 = vector.broadcast %cst_14 : f32 to vector<8x1xf32>
    %39 = arith.select %37, %20, %38 : vector<8x1xi1>, vector<8x1xf32>
    %40 = vector.extract_strided_slice %34 {offsets = [0, 0], sizes = [8, 32], strides = [1, 1]} : vector<8x128xf32> to vector<8x32xf32>
    %41 = vector.broadcast %39 : vector<8x1xf32> to vector<8x32xf32>
    %42 = arith.mulf %40, %41 : vector<8x32xf32>
    %43 = arith.addf %35, %42 : vector<8x32xf32>
    %c1_i32 = arith.constant 1 : i32
    %44 = vector.broadcast %c1_i32 : i32 to vector<8x1xi32>
    %45 = arith.cmpi eq, %27, %44 : vector<8x1xi32>
    %cst_15 = arith.constant 0.000000e+00 : f32
    %46 = vector.broadcast %cst_15 : f32 to vector<8x1xf32>
    %47 = arith.select %45, %20, %46 : vector<8x1xi1>, vector<8x1xf32>
    %48 = vector.extract_strided_slice %34 {offsets = [0, 32], sizes = [8, 32], strides = [1, 1]} : vector<8x128xf32> to vector<8x32xf32>
    %49 = vector.broadcast %47 : vector<8x1xf32> to vector<8x32xf32>
    %50 = arith.mulf %48, %49 : vector<8x32xf32>
    %51 = arith.addf %43, %50 : vector<8x32xf32>
    %c2_i32 = arith.constant 2 : i32
    %52 = vector.broadcast %c2_i32 : i32 to vector<8x1xi32>
    %53 = arith.cmpi eq, %27, %52 : vector<8x1xi32>
    %cst_16 = arith.constant 0.000000e+00 : f32
    %54 = vector.broadcast %cst_16 : f32 to vector<8x1xf32>
    %55 = arith.select %53, %20, %54 : vector<8x1xi1>, vector<8x1xf32>
    %56 = vector.extract_strided_slice %34 {offsets = [0, 64], sizes = [8, 32], strides = [1, 1]} : vector<8x128xf32> to vector<8x32xf32>
    %57 = vector.broadcast %55 : vector<8x1xf32> to vector<8x32xf32>
    %58 = arith.mulf %56, %57 : vector<8x32xf32>
    %59 = arith.addf %51, %58 : vector<8x32xf32>
    %c3_i32 = arith.constant 3 : i32
    %60 = vector.broadcast %c3_i32 : i32 to vector<8x1xi32>
    %61 = arith.cmpi eq, %27, %60 : vector<8x1xi32>
    %cst_17 = arith.constant 0.000000e+00 : f32
    %62 = vector.broadcast %cst_17 : f32 to vector<8x1xf32>
    %63 = arith.select %61, %20, %62 : vector<8x1xi1>, vector<8x1xf32>
    %64 = vector.extract_strided_slice %34 {offsets = [0, 96], sizes = [8, 32], strides = [1, 1]} : vector<8x128xf32> to vector<8x32xf32>
    %65 = vector.broadcast %63 : vector<8x1xf32> to vector<8x32xf32>
    %66 = arith.mulf %64, %65 : vector<8x32xf32>
    %67 = arith.addf %59, %66 : vector<8x32xf32>
    %cst_18 = arith.constant dense<0xFF800000> : vector<8xf32>
    %68 = vector.multi_reduction <maximumf>, %67, %cst_18 [1] : vector<8x32xf32> to vector<8xf32>
    %69 = vector.shape_cast %68 : vector<8xf32> to vector<8x1xf32>
    %70 = vector.broadcast %69 : vector<8x1xf32> to vector<8x32xf32>
    %71 = arith.subf %67, %70 : vector<8x32xf32>
    %72 = math.exp %71 : vector<8x32xf32>
    %cst_19 = arith.constant dense<0.000000e+00> : vector<8xf32>
    %73 = vector.multi_reduction <add>, %72, %cst_19 [1] : vector<8x32xf32> to vector<8xf32>
    %74 = vector.shape_cast %73 : vector<8xf32> to vector<8x1xf32>
    %75 = tpu.reciprocal %74 {approx = true} : vector<8x1xf32> -> vector<8x1xf32>
    %76 = vector.broadcast %75 : vector<8x1xf32> to vector<8x32xf32>
    %77 = arith.mulf %72, %76 : vector<8x32xf32>
    %c0_20 = arith.constant 0 : index
    %c0_21 = arith.constant 0 : index
    %78 = vector.load %arg4[%c0_20, %c0_21] : memref<8x32xf32, #tpu.memory_space<vmem>>, vector<8x32xf32>
    tpu.vector_store %arg4[%c0_20, %c0_21], %77 {strides = array<i32>} : memref<8x32xf32, #tpu.memory_space<vmem>>, vector<8x32xf32>,
    return
  }
  func.func @transform_0(%arg0: i32) -> (i32, i32) {
    %c0_i32 = arith.constant 0 : i32
    %c0_i32_0 = arith.constant 0 : i32
    return %arg0, %c0_i32 : i32, i32
  }
  func.func @transform_1(%arg0: i32) -> (i32, i32) {
    %c0_i32 = arith.constant 0 : i32
    %c0_i32_0 = arith.constant 0 : i32
    %c0_i32_1 = arith.constant 0 : i32
    return %c0_i32, %c0_i32_0 : i32, i32
  }
  func.func @transform_2(%arg0: i32) -> (i32, i32) {
    %c0_i32 = arith.constant 0 : i32
    %c0_i32_0 = arith.constant 0 : i32
    %c0_i32_1 = arith.constant 0 : i32
    return %c0_i32, %c0_i32_0 : i32, i32
  }
  func.func @transform_3(%arg0: i32) -> (i32, i32) {
    %c0_i32 = arith.constant 0 : i32
    %c0_i32_0 = arith.constant 0 : i32
    return %arg0, %c0_i32 : i32, i32
  }
  func.func @transform_4(%arg0: i32) -> (i32, i32) {
    %c0_i32 = arith.constant 0 : i32
    %c0_i32_0 = arith.constant 0 : i32
    return %arg0, %c0_i32 : i32, i32
  }
  func.func @transform_5(%arg0: i32) -> (i32, i32) {
    %c0_i32 = arith.constant 0 : i32
    %c0_i32_0 = arith.constant 0 : i32
    return %arg0, %c0_i32 : i32, i32
  }
}

</mosaic_0001>

<llo_original>
// kernel: tpu_custom_call.1
$region0: #{tpu_custom_call.1}
  #allocation0 [shape = 'u32[]', space=smem, size = 0x4, offset = 0x4, fixed_abs, tag = 'smem constant byte address 0x4 - core index']
  #allocation1 [shape = 'u32[144,128]{1,0:T(1,128)}', space=vmem, size = 0x12000, scoped, tag = 'internal scratch']
  %s0 = inlined_call_operand.hbm [shape: bf16[8,64], index: 0, kind: input, shape index: {}]
  %s1 = inlined_call_operand.hbm [shape: bf16[64,256], index: 1, kind: input, shape index: {}]
  %s2 = inlined_call_operand.vmem [shape: f32[1,128], index: 2, kind: input, shape index: {}]
  %s3 = inlined_call_operand.hbm [shape: f32[8,32], index: 3, kind: output, shape index: {0}]
  %s4 = inlined_call_operand.vmem [shape: f32[8,4], index: 4, kind: output, shape index: {1}]
  %s5 = inlined_call_operand.vmem [shape: f32[8,4], index: 5, kind: output, shape index: {2}]
  %6 = xla_tuple %s3, %s4, %s5
  %s7 = sld [smem:[#allocation0]]
  $region46: #{tpu_custom_call.1} parent=0
    _
  %s9 = ssub.s32 1, %s7
  %s10 = scalar_select 0, %s9, %s7
  $region1: #{tpu_custom_call.1} parent=0
    #allocation2 [shape = 'u8[2048]{0}', space=vmem, size = 0x800, scoped, tag = 'input window, operand 0, single buffered']
    #allocation3 [shape = 's32[1]{0}', space=sflag, size = 0x4, scoped, tag = 'scoped memory for tpu_custom_call.1']
    #allocation4 [shape = 's32[1]{0}', space=sflag, size = 0x4, scoped, tag = 'scoped memory for tpu_custom_call.1']
    #allocation5 [shape = 'u8[32768]{0}', space=vmem, size = 0x8000, scoped, tag = 'input window, operand 1, single buffered']
    #allocation6 [shape = 's32[1]{0}', space=sflag, size = 0x4, scoped, tag = 'scoped memory for tpu_custom_call.1']
    #allocation7 [shape = 'u8[4096]{0}', space=vmem, size = 0x1000, scoped, tag = 'output window, operand 0, single buffered']
    %11 = vsyncpa [#allocation3], 0
    %12 = vsyncpa [#allocation6], 0
    %13 = vsyncpa [#allocation4], 0
    // Predicated region
    $region2: #{tpu_custom_call.1} parent=1 // pred_check
      _
    $region3: #{tpu_custom_call.1} parent=1 // pred_check_branch
      %15 = sbr.rel (0) target = $region5
    $region4: #{tpu_custom_call.1} parent=1 // pred_region
      %s17 = ssub.s32 64, 64
      %18 = vsyncadd [#allocation3], %s17
      %s20 = sshll.u32 [#allocation2], 4
      %s21 = int_to_ptr.vmem [resolvable:$true] %s20
      %23 = dma.hbm_to_vmem [thread:$0]  %s0, 64, %s21, [#allocation3]
    $region5: #{tpu_custom_call.1} parent=1 // pred_fallthru
      _
    // Predicated region
    $region6: #{tpu_custom_call.1} parent=1 // pred_check
      _
    $region7: #{tpu_custom_call.1} parent=1 // pred_check_branch
      %25 = sbr.rel (0) target = $region9
    $region8: #{tpu_custom_call.1} parent=1 // pred_region
      %s27 = ssub.s32 1024, 1024
      %28 = vsyncadd [#allocation6], %s27
      %s29 = sshll.u32 [#allocation5], 4
      %s30 = int_to_ptr.vmem [resolvable:$true] %s29
      %35 = dma.hbm_to_vmem [thread:$0]  %s1, 1024, %s30, [#allocation6], 128, 128, 8
    $region9: #{tpu_custom_call.1} parent=1 // pred_fallthru
      _
    // Predicated region
    $region10: #{tpu_custom_call.1} parent=1 // pred_check
      _
    $region11: #{tpu_custom_call.1} parent=1 // pred_check_branch
      %37 = sbr.rel (0) target = $region13
    $region12: #{tpu_custom_call.1} parent=1 // pred_region
      _
    $region13: #{tpu_custom_call.1} parent=1 // pred_fallthru
      _
    // Predicated region
    $region14: #{tpu_custom_call.1} parent=1 // pred_check
      _
    $region15: #{tpu_custom_call.1} parent=1 // pred_check_branch
      %39 = sbr.rel (0) target = $region17
    $region16: #{tpu_custom_call.1} parent=1 // pred_region
      %40 = dma.done [#allocation3], 64
    $region17: #{tpu_custom_call.1} parent=1 // pred_fallthru
      _
    // Predicated region
    $region18: #{tpu_custom_call.1} parent=1 // pred_check
      _
    $region19: #{tpu_custom_call.1} parent=1 // pred_check_branch
      %42 = sbr.rel (0) target = $region21
    $region20: #{tpu_custom_call.1} parent=1 // pred_region
      %43 = dma.done [#allocation6], 1024
    $region21: #{tpu_custom_call.1} parent=1 // pred_fallthru
      _
    %v45 = vld [vmem:[#allocation2] sm:$0xf]
    %v46 = vld [vmem:[#allocation5] sm:$0xff]
    %v47 = vld [vmem:[#allocation5 + $0x8] sm:$0xff]
    %v48 = vld [vmem:[#allocation5 + $0x10] sm:$0xff]
    %v49 = vld [vmem:[#allocation5 + $0x18] sm:$0xff]
    %v50 = vld [vmem:[#allocation5 + $0x20] sm:$0xff]
    %v51 = vld [vmem:[#allocation5 + $0x28] sm:$0xff]
    %v52 = vld [vmem:[#allocation5 + $0x30] sm:$0xff]
    %v53 = vld [vmem:[#allocation5 + $0x38] sm:$0xff]
    %v62 = vunpack.c.l.b16 %v46
    %v63 = vunpack.c.h.b16 %v46
    %v64 = vunpack.c.l.b16 %v47
    %v65 = vunpack.c.h.b16 %v47
    %v66 = vunpack.c.l.b16 %v48
    %v67 = vunpack.c.h.b16 %v48
    %v68 = vunpack.c.l.b16 %v49
    %v69 = vunpack.c.h.b16 %v49
    %v70 = vunpack.c.l.b16 %v50
    %v71 = vunpack.c.h.b16 %v50
    %v72 = vunpack.c.l.b16 %v51
    %v73 = vunpack.c.h.b16 %v51
    %v74 = vunpack.c.l.b16 %v52
    %v75 = vunpack.c.h.b16 %v52
    %v76 = vunpack.c.l.b16 %v53
    %v77 = vunpack.c.h.b16 %v53
    %v78 = vpack.c.b16 %v64, %v62
    %v79 = vpack.c.b16 %v65, %v63
    %v80 = vpack.c.b16 %v68, %v66
    %v81 = vpack.c.b16 %v69, %v67
    %v82 = vpack.c.b16 %v72, %v70
    %v83 = vpack.c.b16 %v73, %v71
    %v84 = vpack.c.b16 %v76, %v74
    %v85 = vpack.c.b16 %v77, %v75
    %vm94 = vcmask 523264
    %v96 = vsel %vm94, %v45, 0
    %98 = vmatprep.subr.bf16.mxu0 0
    %99 = vmatpush1.bf16.msra.mxu0 0
    %100 = vmatprep.subr.bf16.mxu0 0
    %101 = vmatpush1.bf16.msra.mxu0 0
    %102 = vmatprep.subr.bf16.mxu0 0
    %103 = vmatpush1.bf16.msra.mxu0 0
    %104 = vmatprep.subr.bf16.mxu0 0
    %105 = vmatpush1.bf16.msra.mxu0 0
    %106 = vmatprep.subr.bf16.mxu0 %v85
    %107 = vmatpush1.bf16.msra.mxu0 %v84
    %108 = vmatprep.subr.bf16.mxu0 %v83
    %109 = vmatpush1.bf16.msra.mxu0 %v82
    %110 = vmatprep.subr.bf16.mxu0 %v81
    %111 = vmatpush1.bf16.msra.mxu0 %v80
    %112 = vmatprep.subr.bf16.mxu0 %v79
    %113 = vmatpush1.bf16.msra.mxu0 %v78
    %114 = vmatprep.subr.bf16.mxu0 0
    %115 = vmatpush2.bf16.msra.mxu0 0
    %116 = vmatprep.subr.bf16.mxu0 0
    %117 = vmatpush2.bf16.msra.mxu0 0
    %118 = vmatprep.subr.bf16.mxu0 0
    %119 = vmatpush2.bf16.msra.mxu0 0
    %120 = vmatprep.subr.bf16.mxu0 0
    %121 = vmatpush2.bf16.msra.mxu0 0
    %122 = vmatprep.subr.bf16.mxu0 0
    %123 = vmatpush2.bf16.msra.mxu0 0
    %124 = vmatprep.subr.bf16.mxu0 0
    %125 = vmatpush2.bf16.msra.mxu0 0
    %126 = vmatprep.subr.bf16.mxu0 0
    %127 = vmatpush2.bf16.msra.mxu0 0
    %128 = vmatprep.subr.bf16.mxu0 0
    %129 = vmatpush2.bf16.msra.mxu0 0
    %130 = vmatprep.mubr.bf16.mxu0 0
    %131 = vmatmul.mubr.bf16.gmra.mxu0 %v96
    %v132 = vpop.f32.mrf.mxu0
    %v133 = vadd.f32 0.0, %v132
    %v134 = vpop.f32.mrf.mxu0
    %v135 = vadd.f32 0.0, %v134
    %v136 = vpop.f32.mrf.mxu0
    %v137 = vpop.f32.mrf.mxu0
    %138 = vdwg.mxu0
    %v139 = vld [vmem:[%s2] sm:$0x1]
    %v141 = vlaneseq
    %v142 = vshrl.u32 %v141, 7
    %v143 = vsub.s32 0, %v142
    %v144 = vrot.slane %v139, %v143
    %v146 = vadd.f32 %v133, %v144
    %vm147 = vcmask 31744
    %v148 = vsel %vm147, %v135, -inf
    %149 = vmax.xlane.f32.xlu0 %v148
    %v150 = vpop.xlane.xlu0 %149
    %v151 = vsub.f32 %v135, %v150
    %v152 = vmul.f32 %v151, 1.442695
    %v153 = vpow.pop %v152
    %v154 = vsel %vm147, %v153, 0.0
    %155 = vadd.xlane.f32.xlu0 %v154
    %v156 = vpop.xlane.xlu0 %155
    %v157 = vrcp.pop %v156
    %v158 = vmul.f32 %v153, %v157
    %159 = vst.msk [vmem:[%s5] sm:$0xff] %vm147, %v158
    %v160 = vsel %vm147, %v158, -inf
    %161 = vmax.xlane.f32.xlu0 %v160
    %v162 = vpop.xlane.xlu0 %161
    %v163 = vlaneseq
    %v164 = vand.u32 %v163, 127
    %vm165 = vcmp.eq.f32.partialorder %v158, %v162
    %v166 = vsel %vm165, %v164, 4
    %v167 = vsel %vm147, %v166, 2147483647
    %v168 = vand.u32 %v167, 65535
    %v169 = vshra.s32 %v167, 16
    %v170 = vcvt.s32.f32 %v168
    %v171 = vcvt.s32.f32 %v169
    %172 = vmin.xlane.f32.xlu0 %v171
    %v173 = vpop.xlane.xlu0 %172
    %vm174 = vcmp.eq.f32.partialorder %v171, %v173
    %v175 = vsel %vm174, %v170, inf
    %176 = vmin.xlane.f32.xlu0 %v175
    %v177 = vpop.xlane.xlu0 %176
    %v178 = vcvt.f32.s32 %v177
    %v179 = vcvt.f32.s32 %v173
    %v180 = vshll.u32 %v179, 16
    %v181 = vadd.s32 %v180, %v178
    %vm182 = vcmp.eq.s32.totalorder %v164, %v181
    %v183 = vsel %vm182, 1, 0
    %v184 = vcvt.s32.f32 %v183
    %185 = vst.msk [vmem:[%s4] sm:$0xff] %vm147, %v184
    %v186 = vmul.f32 %v146, %v146
    %v187 = vmul.f32 %v186, %v146
    %vm188 = vcmp.eq.s32.totalorder %v181, 0
    %v189 = vsel %vm188, %v162, 0.0
    %v190 = vmul.f32 %v187, %v189
    %v191 = vadd.f32 %v190, 0.0
    %vm192 = vcmp.eq.s32.totalorder %v181, 1
    %v193 = vsel %vm192, %v162, 0.0
    %v194 = vmul.f32 %v187, %v193
    %196 = vrot.lane.b32.xlu0 %v194, 96
    %v197 = vpop.permute.xlu0 %196
    %v199 = vadd.f32 %v191, %v197
    %vm200 = vcmp.eq.s32.totalorder %v181, 2
    %v201 = vsel %vm200, %v162, 0.0
    %v202 = vmul.f32 %v187, %v201
    %204 = vrot.lane.b32.xlu0 %v202, 64
    %v205 = vpop.permute.xlu0 %204
    %v207 = vadd.f32 %v199, %v205
    %vm208 = vcmp.eq.s32.totalorder %v181, 3
    %v209 = vsel %vm208, %v162, 0.0
    %v210 = vmul.f32 %v187, %v209
    %212 = vrot.lane.b32.xlu0 %v210, 32
    %v213 = vpop.permute.xlu0 %212
    %v215 = vadd.f32 %v207, %v213
    %vm216 = vcmask 261120
    %v217 = vsel %vm216, %v215, -inf
    %218 = vmax.xlane.f32.xlu0 %v217
    %v219 = vpop.xlane.xlu0 %218
    %v220 = vsub.f32 %v215, %v219
    %v221 = vmul.f32 %v220, 1.442695
    %v222 = vpow.pop %v221
    %v223 = vsel %vm216, %v222, 0.0
    %224 = vadd.xlane.f32.xlu0 %v223
    %v225 = vpop.xlane.xlu0 %224
    %v226 = vrcp.pop %v225
    %v227 = vmul.f32 %v222, %v226
    %228 = vst.msk [vmem:[#allocation7] sm:$0xff] %vm216, %v227
    // Predicated region
    $region22: #{tpu_custom_call.1} parent=1 // pred_check
      _
    $region23: #{tpu_custom_call.1} parent=1 // pred_check_branch
      %230 = sbr.rel (0) target = $region25
    $region24: #{tpu_custom_call.1} parent=1 // pred_region
      %s232 = ssub.s32 128, 128
      %233 = vsyncadd [#allocation4], %s232
      %s235 = sshll.u32 [#allocation7], 4
      %s236 = int_to_ptr.vmem [resolvable:$true] %s235
      %238 = dma.vmem_to_hbm [thread:$0]  %s236, 128, %s3, [#allocation4]
    $region25: #{tpu_custom_call.1} parent=1 // pred_fallthru
      _
    // Predicated region
    $region26: #{tpu_custom_call.1} parent=1 // pred_check
      _
    $region27: #{tpu_custom_call.1} parent=1 // pred_check_branch
      %240 = sbr.rel (0) target = $region29
    $region28: #{tpu_custom_call.1} parent=1 // pred_region
      _
    $region29: #{tpu_custom_call.1} parent=1 // pred_fallthru
      _
    // Predicated region
    $region30: #{tpu_custom_call.1} parent=1 // pred_check
      _
    $region31: #{tpu_custom_call.1} parent=1 // pred_check_branch
      %242 = sbr.rel (0) target = $region33
    $region32: #{tpu_custom_call.1} parent=1 // pred_region
      _
    $region33: #{tpu_custom_call.1} parent=1 // pred_fallthru
      _
    // Predicated region
    $region34: #{tpu_custom_call.1} parent=1 // pred_check
      _
    $region35: #{tpu_custom_call.1} parent=1 // pred_check_branch
      %244 = sbr.rel (0) target = $region37
    $region36: #{tpu_custom_call.1} parent=1 // pred_region
      %245 = dma.done [#allocation4], 128
    $region37: #{tpu_custom_call.1} parent=1 // pred_fallthru
      _
    // Predicated region
    $region38: #{tpu_custom_call.1} parent=1 // pred_check
      _
    $region39: #{tpu_custom_call.1} parent=1 // pred_check_branch
      %247 = sbr.rel (0) target = $region41
    $region40: #{tpu_custom_call.1} parent=1 // pred_region
      _
    $region41: #{tpu_custom_call.1} parent=1 // pred_fallthru
      _
    // Predicated region
    $region42: #{tpu_custom_call.1} parent=1 // pred_check
      _
    $region43: #{tpu_custom_call.1} parent=1 // pred_check_branch
      %249 = sbr.rel (0) target = $region45
    $region44: #{tpu_custom_call.1} parent=1 // pred_region
      _
    $region45: #{tpu_custom_call.1} parent=1 // pred_fallthru
      _
    %250 = vsyncpa [#allocation3], 1
    %251 = vsyncpa [#allocation6], 1
    %252 = vsyncpa [#allocation4], 1

</llo_original>
